<compile_context>
chip_gen: v7x
topology: tpu7x:2x2x1
jax: 0.10.0
libtpu: 0.0.40
codegen_flags: <defaults>
</compile_context>

<pallas_src>
import functools

import jax
import jax.numpy as jnp
from jax import lax
from jax.experimental import pallas as pl
from jax.experimental.pallas import tpu as pltpu

_LANES = 128
_SUBLANES = 8


def _disc_loss_kernel(real_ref, gen_ref, out_ref, acc_ref, *,
                      tile_rows, rows_total, num_blocks, need_mask, scale):
    i = pl.program_id(0)

    # acc_ref is a resident (8,128) f32 VMEM accumulator across the grid.
    @pl.when(i == 0)
    def _init():
        acc_ref[...] = jnp.zeros_like(acc_ref)

    diff = real_ref[...].astype(jnp.float32) - gen_ref[...].astype(jnp.float32)
    groups = tile_rows // _SUBLANES

    def _accumulate(d):
        # Layout-trivial reshape: fold sublane groups into one (8,128) vreg.
        acc_ref[...] += jnp.sum(d.reshape(groups, _SUBLANES, _LANES), axis=0)

    if need_mask:
        # Only the last block can be partial; gate the mask to that step so
        # clean steps stay at pure sub+add work.
        is_partial = i == num_blocks - 1

        @pl.when(is_partial)
        def _edge():
            limit = rows_total - i * tile_rows       # valid rows in this block
            row_ids = lax.broadcasted_iota(jnp.int32, diff.shape, 0)
            _accumulate(jnp.where(row_ids < limit, diff, jnp.float32(0.0)))

        @pl.when(jnp.logical_not(is_partial))
        def _clean():
            _accumulate(diff)
    else:
        _accumulate(diff)

    # Fused finalize: one tiny cross-lane reduce + (-1/N) scale, written to a
    # (1,1) SMEM scalar output on the last grid step.
    @pl.when(i == num_blocks - 1)
    def _finalize():
        out_ref[0, 0] = jnp.sum(acc_ref[...]) * jnp.float32(scale)


def discriminator_loss(real_img_score, gen_img_score, *, tile_rows=8192):
    """-mean(real - gen) computed with a Pallas TPU kernel. Returns scalar f32."""
    assert real_img_score.shape == gen_img_score.shape
    total_count = real_img_score.size
    itemsize = jnp.dtype(real_img_score.dtype).itemsize

    flat_r = real_img_score.reshape(-1)
    flat_g = gen_img_score.reshape(-1)
    n = flat_r.shape[0]

    # Pad only to the next multiple of 8*128 (<=1023 zero elements), and only
    # for ragged sizes; zeros contribute nothing and we divide by the true N.
    chunk = _SUBLANES * _LANES
    padded = pl.cdiv(n, chunk) * chunk
    if padded != n:
        flat_r = jnp.pad(flat_r, (0, padded - n))
        flat_g = jnp.pad(flat_g, (0, padded - n))

    rows = padded // _LANES                                  # multiple of 8
    tr = min(max(_SUBLANES, (tile_rows // _SUBLANES) * _SUBLANES), rows)
    num_blocks = pl.cdiv(rows, tr)
    need_mask = (num_blocks * tr) != rows                    # partial last block

    r2d = flat_r.reshape(rows, _LANES)
    g2d = flat_g.reshape(rows, _LANES)

    # 2 inputs x 2 pipeline buffers x block bytes, plus slack; raised above the
    # v5e 16 MiB scoped default, capped well under v7x's 64 MiB physical VMEM.
    block_bytes = tr * _LANES * itemsize
    vmem_limit = int(min(max(4 * block_bytes + (2 << 20), 32 << 20), 48 << 20))

    kernel = functools.partial(
        _disc_loss_kernel, tile_rows=tr, rows_total=rows,
        num_blocks=num_blocks, need_mask=need_mask,
        scale=-1.0 / float(total_count))

    out = pl.pallas_call(
        kernel,
        out_shape=jax.ShapeDtypeStruct((1, 1), jnp.float32),
        grid_spec=pltpu.PrefetchScalarGridSpec(
            num_scalar_prefetch=0,
            grid=(num_blocks,),
            in_specs=[
                pl.BlockSpec((tr, _LANES), lambda i: (i, 0)),
                pl.BlockSpec((tr, _LANES), lambda i: (i, 0)),
            ],
            out_specs=pl.BlockSpec(memory_space=pltpu.MemorySpace.SMEM),
            scratch_shapes=[pltpu.VMEM((_SUBLANES, _LANES), jnp.float32)],
        ),
        compiler_params=pltpu.CompilerParams(
            dimension_semantics=("arbitrary",),
            vmem_limit_bytes=vmem_limit,
        ),
        cost_estimate=pl.CostEstimate(
            flops=2 * total_count,
            transcendentals=0,
            bytes_accessed=2 * total_count * itemsize + 4,
        ),
    )(r2d, g2d)

    return out[0, 0]


if __name__ == "__main__":
    key = jax.random.PRNGKey(0)
    k1, k2 = jax.random.split(key)

    # Discriminator scores for real / generated images (patch-GAN style map).
    shape = (2, 4, 16, 16)
    real_img_score = jax.random.normal(k1, shape, dtype=jnp.float32)
    gen_img_score = jax.random.normal(k2, shape, dtype=jnp.float32)

    loss = jax.block_until_ready(discriminator_loss(real_img_score, gen_img_score))
    ref = -jnp.mean(real_img_score - gen_img_score)
    assert jnp.allclose(loss, ref, atol=1e-6, rtol=1e-6), (loss, ref)

    # Awkward size: exercises the (tiny) zero-pad path, single block.
    shape2 = (2, 4, 17, 15)
    r2 = jax.random.normal(k1, shape2, dtype=jnp.float32)
    g2 = jax.random.normal(k2, shape2, dtype=jnp.float32)
    loss2 = jax.block_until_ready(discriminator_loss(r2, g2))
    ref2 = -jnp.mean(r2 - g2)
    assert jnp.allclose(loss2, ref2, atol=1e-6, rtol=1e-6), (loss2, ref2)

    # Multi-block grid + gated edge mask: rows=2280, tile_rows=1024 -> 3 blocks,
    # last one partial.
    shape3 = (6, 4, 190, 64)
    r3 = jax.random.normal(k1, shape3, dtype=jnp.float32)
    g3 = jax.random.normal(k2, shape3, dtype=jnp.float32)
    loss3 = jax.block_until_ready(discriminator_loss(r3, g3, tile_rows=1024))
    ref3 = -jnp.mean(r3 - g3)
    assert jnp.allclose(loss3, ref3, atol=1e-6, rtol=1e-6), (loss3, ref3)

    print("KERNEL_OK")
</pallas_src>

<mosaic_0001>
module attributes {stable_mosaic.version = 11 : i64} {
  func.func @_disc_loss_kernel(%arg0: i32, %arg1: memref<16x128xf32, #tpu.memory_space<vmem>>, %arg2: memref<16x128xf32, #tpu.memory_space<vmem>>, %arg3: memref<1x1xf32, #tpu.memory_space<smem>>, %arg4: memref<8x128xf32, #tpu.memory_space<vmem>>) attributes {dimension_semantics = [#tpu.dimension_semantics<arbitrary>], iteration_bounds = array<i64: 1>, scalar_prefetch = 0 : i64, scratch_operands = 1 : i64, tpu.core_type = #tpu.core_type<tc>, window_params = [{transform_indices = @transform_0, window_bounds = array<i64: 16, 128>}, {transform_indices = @transform_1, window_bounds = array<i64: 16, 128>}, {transform_indices = @transform_2, window_bounds = array<i64: 1, 1>}]} {
    %c0_i32 = arith.constant 0 : i32
    %0 = arith.cmpi eq, %arg0, %c0_i32 : i32
    %1 = arith.extui %0 : i1 to i32
    %c0_i32_0 = arith.constant 0 : i32
    %2 = arith.cmpi ne, %1, %c0_i32_0 : i32
    scf.if %2 {
      %cst_10 = arith.constant 0.000000e+00 : f32
      %14 = vector.broadcast %cst_10 : f32 to vector<8x128xf32>
      %c0_11 = arith.constant 0 : index
      %c0_12 = arith.constant 0 : index
      %15 = vector.load %arg4[%c0_11, %c0_12] : memref<8x128xf32, #tpu.memory_space<vmem>>, vector<8x128xf32>
      tpu.vector_store %arg4[%c0_11, %c0_12], %14 {strides = array<i32>} : memref<8x128xf32, #tpu.memory_space<vmem>>, vector<8x128xf32>,
    } else {
    }
    %c0 = arith.constant 0 : index
    %c0_1 = arith.constant 0 : index
    %3 = vector.load %arg1[%c0, %c0_1] : memref<16x128xf32, #tpu.memory_space<vmem>>, vector<16x128xf32>
    %c0_2 = arith.constant 0 : index
    %c0_3 = arith.constant 0 : index
    %4 = vector.load %arg2[%c0_2, %c0_3] : memref<16x128xf32, #tpu.memory_space<vmem>>, vector<16x128xf32>
    %5 = arith.subf %3, %4 : vector<16x128xf32>
    %c0_4 = arith.constant 0 : index
    %c0_5 = arith.constant 0 : index
    %6 = vector.load %arg4[%c0_4, %c0_5] : memref<8x128xf32, #tpu.memory_space<vmem>>, vector<8x128xf32>
    %7 = vector.shape_cast %5 : vector<16x128xf32> to vector<2x8x128xf32>
    %cst = arith.constant dense<0.000000e+00> : vector<8x128xf32>
    %8 = vector.multi_reduction <add>, %7, %cst [0] : vector<2x8x128xf32> to vector<8x128xf32>
    %9 = arith.addf %6, %8 : vector<8x128xf32>
    %c0_6 = arith.constant 0 : index
    %c0_7 = arith.constant 0 : index
    %10 = vector.load %arg4[%c0_6, %c0_7] : memref<8x128xf32, #tpu.memory_space<vmem>>, vector<8x128xf32>
    tpu.vector_store %arg4[%c0_6, %c0_7], %9 {strides = array<i32>} : memref<8x128xf32, #tpu.memory_space<vmem>>, vector<8x128xf32>,
    %c0_i32_8 = arith.constant 0 : i32
    %11 = arith.cmpi eq, %arg0, %c0_i32_8 : i32
    %12 = arith.extui %11 : i1 to i32
    %c0_i32_9 = arith.constant 0 : i32
    %13 = arith.cmpi ne, %12, %c0_i32_9 : i32
    scf.if %13 {
      %c0_10 = arith.constant 0 : index
      %c0_11 = arith.constant 0 : index
      %14 = vector.load %arg4[%c0_10, %c0_11] : memref<8x128xf32, #tpu.memory_space<vmem>>, vector<8x128xf32>
      %15 = vector.shape_cast %14 : vector<8x128xf32> to vector<1x8x128xf32>
      %cst_12 = arith.constant dense<0.000000e+00> : vector<1xf32>
      %16 = vector.multi_reduction <add>, %15, %cst_12 [1, 2] : vector<1x8x128xf32> to vector<1xf32>
      %17 = vector.shape_cast %16 : vector<1xf32> to vector<1x1x1xf32>
      %18 = vector.extract %17[0, 0, 0] : f32 from vector<1x1x1xf32>
      %cst_13 = arith.constant -4.8828125E-4 : f32
      %19 = arith.mulf %18, %cst_13 : f32
      %c0_14 = arith.constant 0 : index
      %c0_15 = arith.constant 0 : index
      %20 = memref.load %arg3[%c0_14, %c0_15] : memref<1x1xf32, #tpu.memory_space<smem>>
      memref.store %19, %arg3[%c0_14, %c0_15] : memref<1x1xf32, #tpu.memory_space<smem>>
    } else {
    }
    return
  }
  func.func @transform_0(%arg0: i32) -> (i32, i32) {
    %c0_i32 = arith.constant 0 : i32
    %c0_i32_0 = arith.constant 0 : i32
    return %arg0, %c0_i32 : i32, i32
  }
  func.func @transform_1(%arg0: i32) -> (i32, i32) {
    %c0_i32 = arith.constant 0 : i32
    %c0_i32_0 = arith.constant 0 : i32
    return %arg0, %c0_i32 : i32, i32
  }
  func.func @transform_2(%arg0: i32) -> (i32, i32) {
    %c0_i32 = arith.constant 0 : i32
    %c0_i32_0 = arith.constant 0 : i32
    %c0_i32_1 = arith.constant 0 : i32
    return %c0_i32, %c0_i32_0 : i32, i32
  }
}

</mosaic_0001>

<llo_original>
// kernel: tpu_custom_call.1
$region0: #{tpu_custom_call.1}
  #allocation0 [shape = 'u32[]', space=smem, size = 0x4, offset = 0x4, fixed_abs, tag = 'smem constant byte address 0x4 - core index']
  #allocation1 [shape = 'u32[144,128]{1,0:T(1,128)}', space=vmem, size = 0x12000, scoped, tag = 'internal scratch']
  #allocation2 [shape = 'f32[8,128]{1,0:T(8,128)}', space=vmem, size = 0x1000, scoped, tag = 'scratch operand']
  %s0 = inlined_call_operand.hbm [shape: f32[16,128], index: 0, kind: input, shape index: {}]
  %s1 = inlined_call_operand.hbm [shape: f32[16,128], index: 1, kind: input, shape index: {}]
  %s2 = inlined_call_operand.hbm [shape: f32[1,1], index: 2, kind: output, shape index: {}]
  %s3 = sld [smem:[#allocation0]]
  $region34: #{tpu_custom_call.1} parent=0
    _
  %s5 = ssub.s32 1, %s3
  %s6 = scalar_select 0, %s5, %s3
  $region1: #{tpu_custom_call.1} parent=0
    #allocation3 [shape = 'u8[8192]{0}', space=vmem, size = 0x2000, scoped, tag = 'input window, operand 0, single buffered']
    #allocation4 [shape = 's32[1]{0}', space=sflag, size = 0x4, scoped, tag = 'scoped memory for tpu_custom_call.1']
    #allocation5 [shape = 's32[1]{0}', space=sflag, size = 0x4, scoped, tag = 'scoped memory for tpu_custom_call.1']
    #allocation6 [shape = 'u8[8192]{0}', space=vmem, size = 0x2000, scoped, tag = 'input window, operand 1, single buffered']
    #allocation7 [shape = 's32[1]{0}', space=sflag, size = 0x4, scoped, tag = 'scoped memory for tpu_custom_call.1']
    #allocation8 [shape = 'u8[512]{0}', space=smem, size = 0x200, scoped, tag = 'output window, operand 0, single buffered']
    %7 = vsyncpa [#allocation4], 0
    %8 = vsyncpa [#allocation7], 0
    %9 = vsyncpa [#allocation5], 0
    // Predicated region
    $region2: #{tpu_custom_call.1} parent=1 // pred_check
      _
    $region3: #{tpu_custom_call.1} parent=1 // pred_check_branch
      %11 = sbr.rel (0) target = $region5
    $region4: #{tpu_custom_call.1} parent=1 // pred_region
      %s13 = ssub.s32 256, 256
      %14 = vsyncadd [#allocation4], %s13
      %s15 = sshll.u32 [#allocation3], 4
      %s16 = int_to_ptr.vmem [resolvable:$true] %s15
      %21 = dma.hbm_to_vmem [thread:$0]  %s0, 256, %s16, [#allocation4], 128, 128, 8
    $region5: #{tpu_custom_call.1} parent=1 // pred_fallthru
      _
    // Predicated region
    $region6: #{tpu_custom_call.1} parent=1 // pred_check
      _
    $region7: #{tpu_custom_call.1} parent=1 // pred_check_branch
      %23 = sbr.rel (0) target = $region9
    $region8: #{tpu_custom_call.1} parent=1 // pred_region
      %s25 = ssub.s32 256, 256
      %26 = vsyncadd [#allocation7], %s25
      %s27 = sshll.u32 [#allocation6], 4
      %s28 = int_to_ptr.vmem [resolvable:$true] %s27
      %33 = dma.hbm_to_vmem [thread:$0]  %s1, 256, %s28, [#allocation7], 128, 128, 8
    $region9: #{tpu_custom_call.1} parent=1 // pred_fallthru
      _
    // Predicated region
    $region10: #{tpu_custom_call.1} parent=1 // pred_check
      _
    $region11: #{tpu_custom_call.1} parent=1 // pred_check_branch
      %35 = sbr.rel (0) target = $region13
    $region12: #{tpu_custom_call.1} parent=1 // pred_region
      %36 = dma.done [#allocation4], 256
    $region13: #{tpu_custom_call.1} parent=1 // pred_fallthru
      _
    // Predicated region
    $region14: #{tpu_custom_call.1} parent=1 // pred_check
      _
    $region15: #{tpu_custom_call.1} parent=1 // pred_check_branch
      %38 = sbr.rel (0) target = $region17
    $region16: #{tpu_custom_call.1} parent=1 // pred_region
      %39 = dma.done [#allocation7], 256
    $region17: #{tpu_custom_call.1} parent=1 // pred_fallthru
      _
    %p40 = scmp.eq.s32.totalorder 0, 0
    // Predicated region
    $region18: #{tpu_custom_call.1} parent=1 // pred_check
      %p41 = pneg %p40
    $region19: #{tpu_custom_call.1} parent=1 // pred_check_branch
      %43 = sbr.rel (%p41) target = $region21
    $region20: #{tpu_custom_call.1} parent=1 // pred_region
      %44 = vst [vmem:[#allocation2] sm:$0xff] 0.0
    $region21: #{tpu_custom_call.1} parent=1 // pred_fallthru
      _
    %v45 = vld [vmem:[#allocation3] sm:$0xff]
    %v46 = vld [vmem:[#allocation3 + $0x8] sm:$0xff]
    %v47 = vld [vmem:[#allocation6] sm:$0xff]
    %v48 = vld [vmem:[#allocation6 + $0x8] sm:$0xff]
    %v49 = vsub.f32 %v45, %v47
    %v50 = vsub.f32 %v46, %v48
    %v51 = vld [vmem:[#allocation2] sm:$0xff]
    %v52 = vadd.f32 %v49, %v50
    %v53 = vadd.f32 %v51, %v52
    %54 = vst [vmem:[#allocation2] sm:$0xff] %v53
    // Predicated region
    $region22: #{tpu_custom_call.1} parent=1 // pred_check
      %p55 = pneg %p40
    $region23: #{tpu_custom_call.1} parent=1 // pred_check_branch
      %57 = sbr.rel (%p55) target = $region25
    $region24: #{tpu_custom_call.1} parent=1 // pred_region
      %v58 = vld [vmem:[#allocation2] sm:$0xff]
      %59 = vadd.xlane.f32.xlu0 %v58
      %v60 = vpop.xlane.xlu0 %59
      %v61 = vrot.slane %v60, 4
      %v62 = vadd.f32 %v60, %v61
      %v63 = vrot.slane %v62, 2
      %v64 = vadd.f32 %v62, %v63
      %v65 = vrot.slane %v64, 1
      %v66 = vadd.f32 %v64, %v65
      %s67 = vtos %v66
      %s68 = smul.f32 %s67, -0.00048828125
      %s69 = scalar_lea.smem [#allocation8], 0
      %70 = sst [smem:[%s69]] %s68
    $region25: #{tpu_custom_call.1} parent=1 // pred_fallthru
      _
    // Predicated region
    $region26: #{tpu_custom_call.1} parent=1 // pred_check
      _
    $region27: #{tpu_custom_call.1} parent=1 // pred_check_branch
      %72 = sbr.rel (0) target = $region29
    $region28: #{tpu_custom_call.1} parent=1 // pred_region
      %s74 = ssub.s32 16, 16
      %75 = vsyncadd [#allocation5], %s74
      %78 = dma.smem_to_hbm [#allocation8], 16, %s2, [#allocation5]
    $region29: #{tpu_custom_call.1} parent=1 // pred_fallthru
      _
    // Predicated region
    $region30: #{tpu_custom_call.1} parent=1 // pred_check
      _
    $region31: #{tpu_custom_call.1} parent=1 // pred_check_branch
      %80 = sbr.rel (0) target = $region33
    $region32: #{tpu_custom_call.1} parent=1 // pred_region
      %81 = dma.done [#allocation5], 16
    $region33: #{tpu_custom_call.1} parent=1 // pred_fallthru
      _
    %82 = sfence
    %83 = vsyncpa [#allocation4], 1
    %84 = vsyncpa [#allocation7], 1
    %85 = vsyncpa [#allocation5], 1

</llo_original>
